<compile_context>
chip_gen: v5e
topology: v5e:2x2
jax: 0.10.0
libtpu: 0.0.40
codegen_flags: <defaults>
</compile_context>

<pallas_src>
import jax
import jax.numpy as jnp
from jax.experimental import pallas as pl
from jax.experimental.pallas import tpu as pltpu


# ---------------------------------------------------------------------------
# Kernel: one (batch_tile, out_tile) output block, accumulated over in_tiles.
# Pure GEMM + epilogue: the parameter transform was hoisted to the wrapper.
# ---------------------------------------------------------------------------
def bayesian_linear_kernel(x_ref, xsq_ref, ew_ref, vw_ref, bmu_ref, bvar_ref,
                           eps_ref, out_ref, acc_e_ref, acc_v_ref):
    k = pl.program_id(2)

    @pl.when(k == 0)
    def _():
        acc_e_ref[...] = jnp.zeros_like(acc_e_ref)
        acc_v_ref[...] = jnp.zeros_like(acc_v_ref)

    # bf16 operands, f32 accumulation on the MXU (no transposes in-kernel).
    acc_e_ref[...] += jnp.dot(x_ref[...], ew_ref[...],
                              preferred_element_type=jnp.float32)
    acc_v_ref[...] += jnp.dot(xsq_ref[...], vw_ref[...],
                              preferred_element_type=jnp.float32)

    @pl.when(k == pl.num_programs(2) - 1)
    def _():
        e_b = acc_e_ref[...] + bmu_ref[...]                      # (tm, tn) + (1, tn)
        var_b = acc_v_ref[...] + bvar_ref[...]
        out_ref[...] = (e_b + jnp.sqrt(var_b) * eps_ref[...]).astype(out_ref.dtype)


# ---------------------------------------------------------------------------
# Wrapper: one-time parameter transform + layout prep, grid + BlockSpecs.
# ---------------------------------------------------------------------------
def _round_up(v, m):
    return ((v + m - 1) // m) * m


def _pad2(a, rows, cols):
    pr, pc = rows - a.shape[0], cols - a.shape[1]
    if pr or pc:
        a = jnp.pad(a, ((0, pr), (0, pc)))
    return a


def bayesian_linear_forward(x, params, zk, eps, *, tm=512, tn=512, tk=1024):
    """x: (B, IN) f32, zk: (IN,) f32, eps: (B, OUT) f32.  Returns (B, OUT) f32."""
    B, IN = x.shape
    OUT = params["weight_mu"].shape[0]

    # ---- batch-independent parameter transform: ONCE per forward, plain JAX ----
    alpha_q = jax.nn.sigmoid(params["lambdal"])                     # (OUT, IN)
    w_sigma = jax.nn.softplus(params["weight_rho"])
    wz = params["weight_mu"] * zk                                   # z_k folded in here
    e_w = wz * alpha_q
    var_w = alpha_q * (w_sigma * w_sigma + (1.0 - alpha_q) * wz * wz)
    b_sigma = jax.nn.softplus(params["bias_rho"])
    bias_var = (b_sigma * b_sigma).astype(jnp.float32)
    bias_mu = params["bias_mu"].astype(jnp.float32)

    # ---- tile sizes: sublane/lane aligned, clamped to the padded problem ----
    # (16-aligned batch tile keeps bf16 x / x^2 tiles packing-friendly.)
    tm = min(tm, _round_up(B, 16))
    tn = min(tn, _round_up(OUT, 128))
    tk = min(tk, _round_up(IN, 128))
    Bp, OUTp, INp = _round_up(B, tm), _round_up(OUT, tn), _round_up(IN, tk)

    # ---- one-time layout plumbing (transpose to (IN, OUT), pad, cast) ----
    # Zero padding is exact: padded x columns null the padded weight rows;
    # padded batch rows / OUT columns are sliced away at the end.
    x32 = x.astype(jnp.float32)
    xp = _pad2(x32, Bp, INp).astype(jnp.bfloat16)                   # (Bp, INp)
    xsqp = _pad2(x32 * x32, Bp, INp).astype(jnp.bfloat16)           # (Bp, INp)
    ew_t = _pad2(e_w.T, INp, OUTp).astype(jnp.bfloat16)             # (INp, OUTp)
    vw_t = _pad2(var_w.T, INp, OUTp).astype(jnp.bfloat16)           # (INp, OUTp)
    bmu = _pad2(bias_mu.reshape(1, OUT), 1, OUTp)                   # (1, OUTp) f32
    bvar = _pad2(bias_var.reshape(1, OUT), 1, OUTp)                 # (1, OUTp) f32
    epsp = _pad2(eps.astype(jnp.float32), Bp, OUTp)                 # (Bp, OUTp) f32

    grid = (Bp // tm, OUTp // tn, INp // tk)
    n_btiles, n_otiles = grid[0], grid[1]

    cost = pl.CostEstimate(
        flops=4 * Bp * INp * OUTp,              # two GEMMs, 2 flops/MAC
        transcendentals=0,                      # transform hoisted to wrapper
        bytes_accessed=(
            2 * 2 * INp * OUTp * n_btiles       # e_w^T + var_w^T (bf16), re-read per batch tile
            + 2 * 2 * Bp * INp * n_otiles       # x + x^2 (bf16), re-read per OUT tile
            + 2 * 4 * Bp * OUTp                 # eps in + out (f32)
            + 2 * 4 * OUTp))                    # biases

    out_padded = pl.pallas_call(
        bayesian_linear_kernel,
        out_shape=jax.ShapeDtypeStruct((Bp, OUTp), jnp.float32),
        grid_spec=pltpu.PrefetchScalarGridSpec(
            num_scalar_prefetch=0,
            grid=grid,
            in_specs=[
                pl.BlockSpec((tm, tk), lambda i, j, k: (i, k)),   # x        (bf16)
                pl.BlockSpec((tm, tk), lambda i, j, k: (i, k)),   # x*x      (bf16)
                pl.BlockSpec((tk, tn), lambda i, j, k: (k, j)),   # e_w^T    (bf16)
                pl.BlockSpec((tk, tn), lambda i, j, k: (k, j)),   # var_w^T  (bf16)
                pl.BlockSpec((1, tn), lambda i, j, k: (0, j)),    # bias_mu
                pl.BlockSpec((1, tn), lambda i, j, k: (0, j)),    # bias_sigma^2
                pl.BlockSpec((tm, tn), lambda i, j, k: (i, j)),   # eps
            ],
            out_specs=pl.BlockSpec((tm, tn), lambda i, j, k: (i, j)),
            scratch_shapes=[pltpu.VMEM((tm, tn), jnp.float32),    # acc e_b
                            pltpu.VMEM((tm, tn), jnp.float32)],   # acc var_b
        ),
        compiler_params=pltpu.CompilerParams(
            dimension_semantics=("parallel", "parallel", "arbitrary"),
            vmem_limit_bytes=32 * 1024 * 1024),
        cost_estimate=cost,
    )(xp, xsqp, ew_t, vw_t, bmu, bvar, epsp)

    return out_padded[:B, :OUT]


# ---------------------------------------------------------------------------
# Parameter init / z sampling (plain JAX glue matching BayesianLinear.__init__)
# ---------------------------------------------------------------------------
def init_params(key, in_features, out_features):
    ks = jax.random.split(key, 7)
    weight_mu = jax.random.uniform(ks[0], (out_features, in_features),
                                   minval=-0.01, maxval=0.01, dtype=jnp.float32)
    weight_rho = -9.0 + 0.1 * jax.random.normal(ks[1], (out_features, in_features),
                                                dtype=jnp.float32)
    lambdal = jax.random.uniform(ks[2], (out_features, in_features),
                                 minval=-10.0, maxval=15.0, dtype=jnp.float32)
    bias_mu = jax.random.uniform(ks[3], (out_features,),
                                 minval=-0.2, maxval=0.2, dtype=jnp.float32)
    bias_rho = -9.0 + jax.random.normal(ks[4], (out_features,), dtype=jnp.float32)
    q0_mean = jax.random.normal(ks[5], (in_features,), dtype=jnp.float32)
    q0_log_var = -9.0 + jax.random.normal(ks[6], (in_features,), dtype=jnp.float32)
    return dict(weight_mu=weight_mu, weight_rho=weight_rho, lambdal=lambdal,
                bias_mu=bias_mu, bias_rho=bias_rho,
                q0_mean=q0_mean, q0_log_var=q0_log_var)


def sample_z(key, params):
    """self.z = q0_mean + exp(q0_log_var).sqrt() * eps; identity flow (see TODO)."""
    q0_std = jnp.sqrt(jnp.exp(params["q0_log_var"]))
    eps_z = jax.random.normal(key, params["q0_mean"].shape, dtype=jnp.float32)
    return params["q0_mean"] + q0_std * eps_z


if __name__ == "__main__":
    B, IN, OUT = 8, 32, 16

    root = jax.random.PRNGKey(0)
    k_param, k_x, k_z, k_eps = jax.random.split(root, 4)

    params = init_params(k_param, IN, OUT)
    x = jax.random.normal(k_x, (B, IN), dtype=jnp.float32)
    z_k = sample_z(k_z, params)
    eps = jax.random.normal(k_eps, (B, OUT), dtype=jnp.float32)

    out = bayesian_linear_forward(x, params, z_k, eps)
    out = jax.block_until_ready(out)

    # pure-JAX f32 reference of the same math (kernel runs its GEMMs in bf16
    # with f32 accumulation, so allow ~1e-2 absolute/relative slack).
    alpha_q = jax.nn.sigmoid(params["lambdal"])
    w_sigma = jax.nn.softplus(params["weight_rho"])
    b_sigma = jax.nn.softplus(params["bias_rho"])
    e_w = params["weight_mu"] * alpha_q * z_k
    var_w = alpha_q * (w_sigma**2 + (1 - alpha_q) * params["weight_mu"]**2 * z_k**2)
    e_b = jnp.dot(x, e_w.T, precision=jax.lax.Precision.HIGHEST) + params["bias_mu"]
    var_b = jnp.dot(x**2, var_w.T, precision=jax.lax.Precision.HIGHEST) + b_sigma**2
    ref = e_b + jnp.sqrt(var_b) * eps

    assert out.shape == (B, OUT)
    assert bool(jnp.all(jnp.isfinite(out)))
    assert jnp.allclose(out, ref, atol=1e-2, rtol=1e-2), \
        f"max abs err = {jnp.max(jnp.abs(out - ref))}"

    print("KERNEL_OK")
</pallas_src>

<mosaic_0001>
module attributes {stable_mosaic.version = 11 : i64} {
  func.func @bayesian_linear_kernel(%arg0: i32, %arg1: i32, %arg2: i32, %arg3: memref<16x128xbf16, #tpu.memory_space<vmem>>, %arg4: memref<16x128xbf16, #tpu.memory_space<vmem>>, %arg5: memref<128x128xbf16, #tpu.memory_space<vmem>>, %arg6: memref<128x128xbf16, #tpu.memory_space<vmem>>, %arg7: memref<1x128xf32, #tpu.memory_space<vmem>>, %arg8: memref<1x128xf32, #tpu.memory_space<vmem>>, %arg9: memref<16x128xf32, #tpu.memory_space<vmem>>, %arg10: memref<16x128xf32, #tpu.memory_space<vmem>>, %arg11: memref<16x128xf32, #tpu.memory_space<vmem>>, %arg12: memref<16x128xf32, #tpu.memory_space<vmem>>) attributes {dimension_semantics = [#tpu.dimension_semantics<parallel>, #tpu.dimension_semantics<parallel>, #tpu.dimension_semantics<arbitrary>], iteration_bounds = array<i64: 1, 1, 1>, scalar_prefetch = 0 : i64, scratch_operands = 2 : i64, tpu.core_type = #tpu.core_type<tc>, window_params = [{transform_indices = @transform_0, window_bounds = array<i64: 16, 128>}, {transform_indices = @transform_1, window_bounds = array<i64: 16, 128>}, {transform_indices = @transform_2, window_bounds = array<i64: 128, 128>}, {transform_indices = @transform_3, window_bounds = array<i64: 128, 128>}, {transform_indices = @transform_4, window_bounds = array<i64: 1, 128>}, {transform_indices = @transform_5, window_bounds = array<i64: 1, 128>}, {transform_indices = @transform_6, window_bounds = array<i64: 16, 128>}, {transform_indices = @transform_7, window_bounds = array<i64: 16, 128>}]} {
    %c0_i32 = arith.constant 0 : i32
    %0 = arith.cmpi eq, %arg2, %c0_i32 : i32
    %1 = arith.extui %0 : i1 to i32
    %c0_i32_0 = arith.constant 0 : i32
    %2 = arith.cmpi ne, %1, %c0_i32_0 : i32
    scf.if %2 {
      %cst_19 = arith.constant 0.000000e+00 : f32
      %18 = vector.broadcast %cst_19 : f32 to vector<16x128xf32>
      %c0_20 = arith.constant 0 : index
      %c0_21 = arith.constant 0 : index
      %19 = vector.load %arg11[%c0_20, %c0_21] : memref<16x128xf32, #tpu.memory_space<vmem>>, vector<16x128xf32>
      tpu.vector_store %arg11[%c0_20, %c0_21], %18 {strides = array<i32>} : memref<16x128xf32, #tpu.memory_space<vmem>>, vector<16x128xf32>,
      %cst_22 = arith.constant 0.000000e+00 : f32
      %20 = vector.broadcast %cst_22 : f32 to vector<16x128xf32>
      %c0_23 = arith.constant 0 : index
      %c0_24 = arith.constant 0 : index
      %21 = vector.load %arg12[%c0_23, %c0_24] : memref<16x128xf32, #tpu.memory_space<vmem>>, vector<16x128xf32>
      tpu.vector_store %arg12[%c0_23, %c0_24], %20 {strides = array<i32>} : memref<16x128xf32, #tpu.memory_space<vmem>>, vector<16x128xf32>,
    } else {
    }
    %c0 = arith.constant 0 : index
    %c0_1 = arith.constant 0 : index
    %3 = vector.load %arg11[%c0, %c0_1] : memref<16x128xf32, #tpu.memory_space<vmem>>, vector<16x128xf32>
    %c0_2 = arith.constant 0 : index
    %c0_3 = arith.constant 0 : index
    %4 = vector.load %arg3[%c0_2, %c0_3] : memref<16x128xbf16, #tpu.memory_space<vmem>>, vector<16x128xbf16>
    %c0_4 = arith.constant 0 : index
    %c0_5 = arith.constant 0 : index
    %5 = vector.load %arg5[%c0_4, %c0_5] : memref<128x128xbf16, #tpu.memory_space<vmem>>, vector<128x128xbf16>
    %cst = arith.constant dense<0.000000e+00> : vector<16x128xf32>
    %6 = tpu.matmul %4, %5, %cst {dimension_numbers = #tpu.dot_dimension_numbers<[1], [0], [0], [1], [0, 0, 1, 1], [], []>} : vector<16x128xbf16>, vector<128x128xbf16>, vector<16x128xf32> -> vector<16x128xf32>
    %7 = arith.addf %3, %6 : vector<16x128xf32>
    %c0_6 = arith.constant 0 : index
    %c0_7 = arith.constant 0 : index
    %8 = vector.load %arg11[%c0_6, %c0_7] : memref<16x128xf32, #tpu.memory_space<vmem>>, vector<16x128xf32>
    tpu.vector_store %arg11[%c0_6, %c0_7], %7 {strides = array<i32>} : memref<16x128xf32, #tpu.memory_space<vmem>>, vector<16x128xf32>,
    %c0_8 = arith.constant 0 : index
    %c0_9 = arith.constant 0 : index
    %9 = vector.load %arg12[%c0_8, %c0_9] : memref<16x128xf32, #tpu.memory_space<vmem>>, vector<16x128xf32>
    %c0_10 = arith.constant 0 : index
    %c0_11 = arith.constant 0 : index
    %10 = vector.load %arg4[%c0_10, %c0_11] : memref<16x128xbf16, #tpu.memory_space<vmem>>, vector<16x128xbf16>
    %c0_12 = arith.constant 0 : index
    %c0_13 = arith.constant 0 : index
    %11 = vector.load %arg6[%c0_12, %c0_13] : memref<128x128xbf16, #tpu.memory_space<vmem>>, vector<128x128xbf16>
    %cst_14 = arith.constant dense<0.000000e+00> : vector<16x128xf32>
    %12 = tpu.matmul %10, %11, %cst_14 {dimension_numbers = #tpu.dot_dimension_numbers<[1], [0], [0], [1], [0, 0, 1, 1], [], []>} : vector<16x128xbf16>, vector<128x128xbf16>, vector<16x128xf32> -> vector<16x128xf32>
    %13 = arith.addf %9, %12 : vector<16x128xf32>
    %c0_15 = arith.constant 0 : index
    %c0_16 = arith.constant 0 : index
    %14 = vector.load %arg12[%c0_15, %c0_16] : memref<16x128xf32, #tpu.memory_space<vmem>>, vector<16x128xf32>
    tpu.vector_store %arg12[%c0_15, %c0_16], %13 {strides = array<i32>} : memref<16x128xf32, #tpu.memory_space<vmem>>, vector<16x128xf32>,
    %c0_i32_17 = arith.constant 0 : i32
    %15 = arith.cmpi eq, %arg2, %c0_i32_17 : i32
    %16 = arith.extui %15 : i1 to i32
    %c0_i32_18 = arith.constant 0 : i32
    %17 = arith.cmpi ne, %16, %c0_i32_18 : i32
    scf.if %17 {
      %c0_19 = arith.constant 0 : index
      %c0_20 = arith.constant 0 : index
      %18 = vector.load %arg11[%c0_19, %c0_20] : memref<16x128xf32, #tpu.memory_space<vmem>>, vector<16x128xf32>
      %c0_21 = arith.constant 0 : index
      %c0_22 = arith.constant 0 : index
      %19 = vector.load %arg7[%c0_21, %c0_22] : memref<1x128xf32, #tpu.memory_space<vmem>>, vector<1x128xf32>
      %20 = vector.broadcast %19 : vector<1x128xf32> to vector<16x128xf32>
      %21 = arith.addf %18, %20 : vector<16x128xf32>
      %c0_23 = arith.constant 0 : index
      %c0_24 = arith.constant 0 : index
      %22 = vector.load %arg12[%c0_23, %c0_24] : memref<16x128xf32, #tpu.memory_space<vmem>>, vector<16x128xf32>
      %c0_25 = arith.constant 0 : index
      %c0_26 = arith.constant 0 : index
      %23 = vector.load %arg8[%c0_25, %c0_26] : memref<1x128xf32, #tpu.memory_space<vmem>>, vector<1x128xf32>
      %24 = vector.broadcast %23 : vector<1x128xf32> to vector<16x128xf32>
      %25 = arith.addf %22, %24 : vector<16x128xf32>
      %26 = math.sqrt %25 : vector<16x128xf32>
      %c0_27 = arith.constant 0 : index
      %c0_28 = arith.constant 0 : index
      %27 = vector.load %arg9[%c0_27, %c0_28] : memref<16x128xf32, #tpu.memory_space<vmem>>, vector<16x128xf32>
      %28 = arith.mulf %26, %27 : vector<16x128xf32>
      %29 = arith.addf %21, %28 : vector<16x128xf32>
      %c0_29 = arith.constant 0 : index
      %c0_30 = arith.constant 0 : index
      %30 = vector.load %arg10[%c0_29, %c0_30] : memref<16x128xf32, #tpu.memory_space<vmem>>, vector<16x128xf32>
      tpu.vector_store %arg10[%c0_29, %c0_30], %29 {strides = array<i32>} : memref<16x128xf32, #tpu.memory_space<vmem>>, vector<16x128xf32>,
    } else {
    }
    return
  }
  func.func @transform_0(%arg0: i32, %arg1: i32, %arg2: i32) -> (i32, i32) {
    %c0_i32 = arith.constant 0 : i32
    return %arg0, %arg2 : i32, i32
  }
  func.func @transform_1(%arg0: i32, %arg1: i32, %arg2: i32) -> (i32, i32) {
    %c0_i32 = arith.constant 0 : i32
    return %arg0, %arg2 : i32, i32
  }
  func.func @transform_2(%arg0: i32, %arg1: i32, %arg2: i32) -> (i32, i32) {
    %c0_i32 = arith.constant 0 : i32
    return %arg2, %arg1 : i32, i32
  }
  func.func @transform_3(%arg0: i32, %arg1: i32, %arg2: i32) -> (i32, i32) {
    %c0_i32 = arith.constant 0 : i32
    return %arg2, %arg1 : i32, i32
  }
  func.func @transform_4(%arg0: i32, %arg1: i32, %arg2: i32) -> (i32, i32) {
    %c0_i32 = arith.constant 0 : i32
    %c0_i32_0 = arith.constant 0 : i32
    return %c0_i32, %arg1 : i32, i32
  }
  func.func @transform_5(%arg0: i32, %arg1: i32, %arg2: i32) -> (i32, i32) {
    %c0_i32 = arith.constant 0 : i32
    %c0_i32_0 = arith.constant 0 : i32
    return %c0_i32, %arg1 : i32, i32
  }
  func.func @transform_6(%arg0: i32, %arg1: i32, %arg2: i32) -> (i32, i32) {
    %c0_i32 = arith.constant 0 : i32
    return %arg0, %arg1 : i32, i32
  }
  func.func @transform_7(%arg0: i32, %arg1: i32, %arg2: i32) -> (i32, i32) {
    %c0_i32 = arith.constant 0 : i32
    return %arg0, %arg1 : i32, i32
  }
}

</mosaic_0001>

<llo_original>
// kernel: tpu_custom_call.1
$region0: #{tpu_custom_call.1}
  #allocation0 [shape = 'u32[]', space=smem, size = 0x4, offset = 0x4, fixed_abs, tag = 'smem constant byte address 0x4 - core index']
  #allocation1 [shape = 'u32[72,128]{1,0:T(1,128)}', space=vmem, size = 0x9000, scoped, tag = 'internal scratch']
  #allocation2 [shape = 'f32[16,128]{1,0:T(8,128)}', space=vmem, size = 0x2000, scoped, tag = 'scratch operand']
  #allocation3 [shape = 'f32[16,128]{1,0:T(8,128)}', space=vmem, size = 0x2000, scoped, tag = 'scratch operand']
  %s0 = inlined_call_operand.hbm [shape: bf16[16,128], index: 0, kind: input, shape index: {}]
  %s1 = inlined_call_operand.hbm [shape: bf16[16,128], index: 1, kind: input, shape index: {}]
  %s2 = inlined_call_operand.hbm [shape: bf16[128,128], index: 2, kind: input, shape index: {}]
  %s3 = inlined_call_operand.hbm [shape: bf16[128,128], index: 3, kind: input, shape index: {}]
  %s4 = inlined_call_operand.vmem [shape: f32[1,128], index: 4, kind: input, shape index: {}]
  %s5 = inlined_call_operand.vmem [shape: f32[1,128], index: 5, kind: input, shape index: {}]
  %s6 = inlined_call_operand.hbm [shape: f32[16,128], index: 6, kind: input, shape index: {}]
  %s7 = inlined_call_operand.hbm [shape: f32[16,128], index: 7, kind: output, shape index: {}]
  %s8 = sld [smem:[#allocation0]]
  $region66: #{tpu_custom_call.1} parent=0
    _
  %s10 = ssub.s32 1, %s8
  %s11 = scalar_select 0, %s10, %s8
  $region1: #{tpu_custom_call.1} parent=0
    #allocation4 [shape = 'u8[4096]{0}', space=vmem, size = 0x1000, scoped, tag = 'input window, operand 0, single buffered']
    #allocation5 [shape = 's32[1]{0}', space=sflag, size = 0x4, scoped, tag = 'scoped memory for tpu_custom_call.1']
    #allocation6 [shape = 's32[1]{0}', space=sflag, size = 0x4, scoped, tag = 'scoped memory for tpu_custom_call.1']
    #allocation7 [shape = 'u8[4096]{0}', space=vmem, size = 0x1000, scoped, tag = 'input window, operand 1, single buffered']
    #allocation8 [shape = 's32[1]{0}', space=sflag, size = 0x4, scoped, tag = 'scoped memory for tpu_custom_call.1']
    #allocation9 [shape = 'u8[32768]{0}', space=vmem, size = 0x8000, scoped, tag = 'input window, operand 2, single buffered']
    #allocation10 [shape = 'u8[32768]{0}', space=vmem, size = 0x8000, scoped, tag = 'input window, operand 3, single buffered']
    #allocation11 [shape = 's32[1]{0}', space=sflag, size = 0x4, scoped, tag = 'scoped memory for tpu_custom_call.1']
    #allocation12 [shape = 'u8[8192]{0}', space=vmem, size = 0x2000, scoped, tag = 'input window, operand 6, single buffered']
    #allocation13 [shape = 'u8[8192]{0}', space=vmem, size = 0x2000, scoped, tag = 'output window, operand 0, single buffered']
    %12 = vsyncpa [#allocation5], 0
    %13 = vsyncpa [#allocation8], 0
    %14 = vsyncpa [#allocation11], 0
    %15 = vsyncpa [#allocation6], 0
    // Predicated region
    $region2: #{tpu_custom_call.1} parent=1 // pred_check
      _
    $region3: #{tpu_custom_call.1} parent=1 // pred_check_branch
      %17 = sbr.rel (0) target = $region5
    $region4: #{tpu_custom_call.1} parent=1 // pred_region
      %19 = vsyncadd [#allocation5], 0
      %s20 = sshll.u32 %s0, 4
      %s21 = int_to_ptr.hbm [resolvable:$true] %s20
      %s22 = sshll.u32 [#allocation4], 4
      %s23 = int_to_ptr.vmem [resolvable:$true] %s22
      %28 = dma.hbm_to_vmem [thread:$0]  %s21, 128, %s23, [#allocation5], 64, 64, 4
    $region5: #{tpu_custom_call.1} parent=1 // pred_fallthru
      _
    // Predicated region
    $region6: #{tpu_custom_call.1} parent=1 // pred_check
      _
    $region7: #{tpu_custom_call.1} parent=1 // pred_check_branch
      %30 = sbr.rel (0) target = $region9
    $region8: #{tpu_custom_call.1} parent=1 // pred_region
      %32 = vsyncadd [#allocation8], 0
      %s33 = sshll.u32 %s1, 4
      %s34 = int_to_ptr.hbm [resolvable:$true] %s33
      %s35 = sshll.u32 [#allocation7], 4
      %s36 = int_to_ptr.vmem [resolvable:$true] %s35
      %41 = dma.hbm_to_vmem [thread:$0]  %s34, 128, %s36, [#allocation8], 64, 64, 4
    $region9: #{tpu_custom_call.1} parent=1 // pred_fallthru
      _
    // Predicated region
    $region10: #{tpu_custom_call.1} parent=1 // pred_check
      _
    $region11: #{tpu_custom_call.1} parent=1 // pred_check_branch
      %43 = sbr.rel (0) target = $region13
    $region12: #{tpu_custom_call.1} parent=1 // pred_region
      %45 = vsyncadd [#allocation8], 0
      %s46 = sshll.u32 %s2, 4
      %s47 = int_to_ptr.hbm [resolvable:$true] %s46
      %s48 = sshll.u32 [#allocation9], 4
      %s49 = int_to_ptr.vmem [resolvable:$true] %s48
      %54 = dma.hbm_to_vmem [thread:$0]  %s47, 1024, %s49, [#allocation8], 64, 64, 4
    $region13: #{tpu_custom_call.1} parent=1 // pred_fallthru
      _
    // Predicated region
    $region14: #{tpu_custom_call.1} parent=1 // pred_check
      _
    $region15: #{tpu_custom_call.1} parent=1 // pred_check_branch
      %56 = sbr.rel (0) target = $region17
    $region16: #{tpu_custom_call.1} parent=1 // pred_region
      %58 = vsyncadd [#allocation11], 0
      %s59 = sshll.u32 %s3, 4
      %s60 = int_to_ptr.hbm [resolvable:$true] %s59
      %s61 = sshll.u32 [#allocation10], 4
      %s62 = int_to_ptr.vmem [resolvable:$true] %s61
      %67 = dma.hbm_to_vmem [thread:$0]  %s60, 1024, %s62, [#allocation11], 64, 64, 4
    $region17: #{tpu_custom_call.1} parent=1 // pred_fallthru
      _
    // Predicated region
    $region18: #{tpu_custom_call.1} parent=1 // pred_check
      _
    $region19: #{tpu_custom_call.1} parent=1 // pred_check_branch
      %69 = sbr.rel (0) target = $region21
    $region20: #{tpu_custom_call.1} parent=1 // pred_region
      _
    $region21: #{tpu_custom_call.1} parent=1 // pred_fallthru
      _
    // Predicated region
    $region22: #{tpu_custom_call.1} parent=1 // pred_check
      _
    $region23: #{tpu_custom_call.1} parent=1 // pred_check_branch
      %71 = sbr.rel (0) target = $region25
    $region24: #{tpu_custom_call.1} parent=1 // pred_region
      _
    $region25: #{tpu_custom_call.1} parent=1 // pred_fallthru
      _
    // Predicated region
    $region26: #{tpu_custom_call.1} parent=1 // pred_check
      _
    $region27: #{tpu_custom_call.1} parent=1 // pred_check_branch
      %73 = sbr.rel (0) target = $region29
    $region28: #{tpu_custom_call.1} parent=1 // pred_region
      %75 = vsyncadd [#allocation11], 0
      %s76 = sshll.u32 %s6, 4
      %s77 = int_to_ptr.hbm [resolvable:$true] %s76
      %s78 = sshll.u32 [#allocation12], 4
      %s79 = int_to_ptr.vmem [resolvable:$true] %s78
      %84 = dma.hbm_to_vmem [thread:$0]  %s77, 256, %s79, [#allocation11], 128, 128, 8
    $region29: #{tpu_custom_call.1} parent=1 // pred_fallthru
      _
    // Predicated region
    $region30: #{tpu_custom_call.1} parent=1 // pred_check
      _
    $region31: #{tpu_custom_call.1} parent=1 // pred_check_branch
      %86 = sbr.rel (0) target = $region33
    $region32: #{tpu_custom_call.1} parent=1 // pred_region
      %88 = dma.done [#allocation5], 128
    $region33: #{tpu_custom_call.1} parent=1 // pred_fallthru
      _
    // Predicated region
    $region34: #{tpu_custom_call.1} parent=1 // pred_check
      _
    $region35: #{tpu_custom_call.1} parent=1 // pred_check_branch
      %90 = sbr.rel (0) target = $region37
    $region36: #{tpu_custom_call.1} parent=1 // pred_region
      %92 = dma.done [#allocation8], 128
    $region37: #{tpu_custom_call.1} parent=1 // pred_fallthru
      _
    // Predicated region
    $region38: #{tpu_custom_call.1} parent=1 // pred_check
      _
    $region39: #{tpu_custom_call.1} parent=1 // pred_check_branch
      %94 = sbr.rel (0) target = $region41
    $region40: #{tpu_custom_call.1} parent=1 // pred_region
      %96 = dma.done [#allocation8], 1024
    $region41: #{tpu_custom_call.1} parent=1 // pred_fallthru
      _
    // Predicated region
    $region42: #{tpu_custom_call.1} parent=1 // pred_check
      _
    $region43: #{tpu_custom_call.1} parent=1 // pred_check_branch
      %98 = sbr.rel (0) target = $region45
    $region44: #{tpu_custom_call.1} parent=1 // pred_region
      %100 = dma.done [#allocation11], 1024
    $region45: #{tpu_custom_call.1} parent=1 // pred_fallthru
      _
    // Predicated region
    $region46: #{tpu_custom_call.1} parent=1 // pred_check
      _
    $region47: #{tpu_custom_call.1} parent=1 // pred_check_branch
      %102 = sbr.rel (0) target = $region49
    $region48: #{tpu_custom_call.1} parent=1 // pred_region
      %104 = dma.done [#allocation11], 256
    $region49: #{tpu_custom_call.1} parent=1 // pred_fallthru
      _
    %p105 = scmp.eq.s32.totalorder 0, 0
    // Predicated region
    $region50: #{tpu_custom_call.1} parent=1 // pred_check
      %p106 = pneg %p105
    $region51: #{tpu_custom_call.1} parent=1 // pred_check_branch
      %108 = sbr.rel (%p106) target = $region53
    $region52: #{tpu_custom_call.1} parent=1 // pred_region
      %109 = vst [vmem:[#allocation2] sm:$0xff] 0.0
      %110 = vst [vmem:[#allocation2 + $0x8] sm:$0xff] 0.0
      %111 = vst [vmem:[#allocation3] sm:$0xff] 0.0
      %112 = vst [vmem:[#allocation3 + $0x8] sm:$0xff] 0.0
    $region53: #{tpu_custom_call.1} parent=1 // pred_fallthru
      _
    %v113 = vld [vmem:[#allocation2] sm:$0xff]
    %v114 = vld [vmem:[#allocation2 + $0x8] sm:$0xff]
    %v115 = vld [vmem:[#allocation4] sm:$0xf]
    %v116 = vld [vmem:[#allocation4 + $0x4] sm:$0xf]
    %v117 = vld [vmem:[#allocation9] sm:$0xf]
    %v118 = vld [vmem:[#allocation9 + $0x4] sm:$0xf]
    %v119 = vld [vmem:[#allocation9 + $0x8] sm:$0xf]
    %v120 = vld [vmem:[#allocation9 + $0xc] sm:$0xf]
    %v121 = vld [vmem:[#allocation9 + $0x10] sm:$0xf]
    %v122 = vld [vmem:[#allocation9 + $0x14] sm:$0xf]
    %v123 = vld [vmem:[#allocation9 + $0x18] sm:$0xf]
    %v124 = vld [vmem:[#allocation9 + $0x1c] sm:$0xf]
    %v125 = vld [vmem:[#allocation9 + $0x20] sm:$0xf]
    %v126 = vld [vmem:[#allocation9 + $0x24] sm:$0xf]
    %v127 = vld [vmem:[#allocation9 + $0x28] sm:$0xf]
    %v128 = vld [vmem:[#allocation9 + $0x2c] sm:$0xf]
    %v129 = vld [vmem:[#allocation9 + $0x30] sm:$0xf]
    %v130 = vld [vmem:[#allocation9 + $0x34] sm:$0xf]
    %v131 = vld [vmem:[#allocation9 + $0x38] sm:$0xf]
    %v132 = vld [vmem:[#allocation9 + $0x3c] sm:$0xf]
    %v135 = vunpack.c.l.b16 %v115
    %v136 = vunpack.c.l.b16 %v116
    %v137 = vpack.c.b16 %v136, %v135
    %v155 = vunpack.c.l.b16 %v117
    %v156 = vunpack.c.l.b16 %v118
    %v157 = vunpack.c.l.b16 %v119
    %v158 = vunpack.c.l.b16 %v120
    %v159 = vunpack.c.l.b16 %v121
    %v160 = vunpack.c.l.b16 %v122
    %v161 = vunpack.c.l.b16 %v123
    %v162 = vunpack.c.l.b16 %v124
    %v163 = vunpack.c.l.b16 %v125
    %v164 = vunpack.c.l.b16 %v126
    %v165 = vunpack.c.l.b16 %v127
    %v166 = vunpack.c.l.b16 %v128
    %v167 = vunpack.c.l.b16 %v129
    %v168 = vunpack.c.l.b16 %v130
    %v169 = vunpack.c.l.b16 %v131
    %v170 = vunpack.c.l.b16 %v132
    %v171 = vpack.c.b16 %v156, %v155
    %v172 = vpack.c.b16 %v158, %v157
    %v173 = vpack.c.b16 %v160, %v159
    %v174 = vpack.c.b16 %v162, %v161
    %v175 = vpack.c.b16 %v164, %v163
    %v176 = vpack.c.b16 %v166, %v165
    %v177 = vpack.c.b16 %v168, %v167
    %v178 = vpack.c.b16 %v170, %v169
    %187 = vmatpush.bf16.msra.mxu0 %v178
    %188 = vmatpush.bf16.msra.mxu0 %v177
    %189 = vmatpush.bf16.msra.mxu0 %v176
    %190 = vmatpush.bf16.msra.mxu0 %v175
    %191 = vmatpush.bf16.msra.mxu0 %v174
    %192 = vmatpush.bf16.msra.mxu0 %v173
    %193 = vmatpush.bf16.msra.mxu0 %v172
    %194 = vmatpush.bf16.msra.mxu0 %v171
    %195 = vmatmul.bf16.gmra.mxu0 %v137
    %v196 = vpop.f32.mrf.mxu0
    %v197 = vadd.f32 0.0, %v196
    %v198 = vpop.f32.mrf.mxu0
    %v199 = vadd.f32 0.0, %v198
    %200 = vdwg.mxu0
    %v201 = vadd.f32 %v113, %v197
    %v202 = vadd.f32 %v114, %v199
    %203 = vst [vmem:[#allocation2] sm:$0xff] %v201
    %204 = vst [vmem:[#allocation2 + $0x8] sm:$0xff] %v202
    %v205 = vld [vmem:[#allocation3] sm:$0xff]
    %v206 = vld [vmem:[#allocation3 + $0x8] sm:$0xff]
    %v207 = vld [vmem:[#allocation7] sm:$0xf]
    %v208 = vld [vmem:[#allocation7 + $0x4] sm:$0xf]
    %v209 = vld [vmem:[#allocation10] sm:$0xf]
    %v210 = vld [vmem:[#allocation10 + $0x4] sm:$0xf]
    %v211 = vld [vmem:[#allocation10 + $0x8] sm:$0xf]
    %v212 = vld [vmem:[#allocation10 + $0xc] sm:$0xf]
    %v213 = vld [vmem:[#allocation10 + $0x10] sm:$0xf]
    %v214 = vld [vmem:[#allocation10 + $0x14] sm:$0xf]
    %v215 = vld [vmem:[#allocation10 + $0x18] sm:$0xf]
    %v216 = vld [vmem:[#allocation10 + $0x1c] sm:$0xf]
    %v217 = vld [vmem:[#allocation10 + $0x20] sm:$0xf]
    %v218 = vld [vmem:[#allocation10 + $0x24] sm:$0xf]
    %v219 = vld [vmem:[#allocation10 + $0x28] sm:$0xf]
    %v220 = vld [vmem:[#allocation10 + $0x2c] sm:$0xf]
    %v221 = vld [vmem:[#allocation10 + $0x30] sm:$0xf]
    %v222 = vld [vmem:[#allocation10 + $0x34] sm:$0xf]
    %v223 = vld [vmem:[#allocation10 + $0x38] sm:$0xf]
    %v224 = vld [vmem:[#allocation10 + $0x3c] sm:$0xf]
    %v227 = vunpack.c.l.b16 %v207
    %v228 = vunpack.c.l.b16 %v208
    %v229 = vpack.c.b16 %v228, %v227
    %v247 = vunpack.c.l.b16 %v209
    %v248 = vunpack.c.l.b16 %v210
    %v249 = vunpack.c.l.b16 %v211
    %v250 = vunpack.c.l.b16 %v212
    %v251 = vunpack.c.l.b16 %v213
    %v252 = vunpack.c.l.b16 %v214
    %v253 = vunpack.c.l.b16 %v215
    %v254 = vunpack.c.l.b16 %v216
    %v255 = vunpack.c.l.b16 %v217
    %v256 = vunpack.c.l.b16 %v218
    %v257 = vunpack.c.l.b16 %v219
    %v258 = vunpack.c.l.b16 %v220
    %v259 = vunpack.c.l.b16 %v221
    %v260 = vunpack.c.l.b16 %v222
    %v261 = vunpack.c.l.b16 %v223
    %v262 = vunpack.c.l.b16 %v224
    %v263 = vpack.c.b16 %v248, %v247
    %v264 = vpack.c.b16 %v250, %v249
    %v265 = vpack.c.b16 %v252, %v251
    %v266 = vpack.c.b16 %v254, %v253
    %v267 = vpack.c.b16 %v256, %v255
    %v268 = vpack.c.b16 %v258, %v257
    %v269 = vpack.c.b16 %v260, %v259
    %v270 = vpack.c.b16 %v262, %v261
    %279 = vmatpush.bf16.msra.mxu0 %v270
    %280 = vmatpush.bf16.msra.mxu0 %v269
    %281 = vmatpush.bf16.msra.mxu0 %v268
    %282 = vmatpush.bf16.msra.mxu0 %v267
    %283 = vmatpush.bf16.msra.mxu0 %v266
    %284 = vmatpush.bf16.msra.mxu0 %v265
    %285 = vmatpush.bf16.msra.mxu0 %v264
    %286 = vmatpush.bf16.msra.mxu0 %v263
    %287 = vmatmul.bf16.gmra.mxu0 %v229
    %v288 = vpop.f32.mrf.mxu0
    %v289 = vadd.f32 0.0, %v288
    %v290 = vpop.f32.mrf.mxu0
    %v291 = vadd.f32 0.0, %v290
    %292 = vdwg.mxu0
    %v293 = vadd.f32 %v205, %v289
    %v294 = vadd.f32 %v206, %v291
    %295 = vst [vmem:[#allocation3] sm:$0xff] %v293
    %296 = vst [vmem:[#allocation3 + $0x8] sm:$0xff] %v294
    // Predicated region
    $region54: #{tpu_custom_call.1} parent=1 // pred_check
      %p297 = pneg %p105
    $region55: #{tpu_custom_call.1} parent=1 // pred_check_branch
      %299 = sbr.rel (%p297) target = $region57
    $region56: #{tpu_custom_call.1} parent=1 // pred_region
      %v300 = vld [vmem:[#allocation2] sm:$0xff]
      %v301 = vld [vmem:[#allocation2 + $0x8] sm:$0xff]
      %v302 = vld [vmem:[%s4] sm:$0x1]
      %v304 = vperm.slane %v302, 0
      %v306 = vadd.f32 %v300, %v304
      %v307 = vadd.f32 %v301, %v304
      %v308 = vld [vmem:[#allocation3] sm:$0xff]
      %v309 = vld [vmem:[#allocation3 + $0x8] sm:$0xff]
      %v310 = vld [vmem:[%s5] sm:$0x1]
      %v312 = vperm.slane %v310, 0
      %v314 = vadd.f32 %v308, %v312
      %v315 = vadd.f32 %v309, %v312
      %v316 = vrsqrt.pop %v314
      %v317 = vmul.f32 %v316, %v314
      %v318 = vmul.f32 %v317, %v316
      %v319 = vmul.f32 0.5, %v318
      %v320 = vsub.f32 1.5, %v319
      %v321 = vmul.f32 %v316, %v320
      %v322 = vmul.f32 %v314, %v321
      %vm323 = vcmp.eq.f32.partialorder %v314, inf
      %v324 = vsel %vm323, %v314, %v322
      %vm325 = vcmp.eq.f32.partialorder %v314, 0.0
      %v326 = vand.u32 %v314, 2147483648
      %v327 = vsel %vm325, %v326, %v324
      %v328 = vrsqrt.pop %v315
      %v329 = vmul.f32 %v328, %v315
      %v330 = vmul.f32 %v329, %v328
      %v331 = vmul.f32 0.5, %v330
      %v332 = vsub.f32 1.5, %v331
      %v333 = vmul.f32 %v328, %v332
      %v334 = vmul.f32 %v315, %v333
      %vm335 = vcmp.eq.f32.partialorder %v315, inf
      %v336 = vsel %vm335, %v315, %v334
      %vm337 = vcmp.eq.f32.partialorder %v315, 0.0
      %v338 = vand.u32 %v315, 2147483648
      %v339 = vsel %vm337, %v338, %v336
      %v340 = vld [vmem:[#allocation12] sm:$0xff]
      %v341 = vld [vmem:[#allocation12 + $0x8] sm:$0xff]
      %v342 = vmul.f32 %v327, %v340
      %v343 = vmul.f32 %v339, %v341
      %v344 = vadd.f32 %v306, %v342
      %v345 = vadd.f32 %v307, %v343
      %346 = vst [vmem:[#allocation13] sm:$0xff] %v344
      %347 = vst [vmem:[#allocation13 + $0x8] sm:$0xff] %v345
    $region57: #{tpu_custom_call.1} parent=1 // pred_fallthru
      _
    // Predicated region
    $region58: #{tpu_custom_call.1} parent=1 // pred_check
      _
    $region59: #{tpu_custom_call.1} parent=1 // pred_check_branch
      %349 = sbr.rel (0) target = $region61
    $region60: #{tpu_custom_call.1} parent=1 // pred_region
      %351 = vsyncadd [#allocation6], 0
      %s352 = sshll.u32 [#allocation13], 4
      %s353 = int_to_ptr.vmem [resolvable:$true] %s352
      %s354 = sshll.u32 %s7, 4
      %s355 = int_to_ptr.hbm [resolvable:$true] %s354
      %360 = dma.vmem_to_hbm [thread:$0]  %s353, 256, %s355, [#allocation6], 128, 128, 8
    $region61: #{tpu_custom_call.1} parent=1 // pred_fallthru
      _
    // Predicated region
    $region62: #{tpu_custom_call.1} parent=1 // pred_check
      _
    $region63: #{tpu_custom_call.1} parent=1 // pred_check_branch
      %362 = sbr.rel (0) target = $region65
    $region64: #{tpu_custom_call.1} parent=1 // pred_region
      %364 = dma.done [#allocation6], 256
    $region65: #{tpu_custom_call.1} parent=1 // pred_fallthru
      _
    %365 = vsyncpa [#allocation5], 1
    %366 = vsyncpa [#allocation8], 1
    %367 = vsyncpa [#allocation11], 1
    %368 = vsyncpa [#allocation6], 1

</llo_original>
